<compile_context>
chip_gen: v7x
topology: tpu7x:2x2x1
jax: 0.10.0
libtpu: 0.0.40
codegen_flags: <defaults>
</compile_context>

<pallas_src>
import math

import jax
import jax.numpy as jnp
from jax.experimental import pallas as pl
from jax.experimental.pallas import tpu as pltpu


# --------------------------------------------------------------------------- #
# Kernels
# --------------------------------------------------------------------------- #
def _linear_kernel_acc(x_ref, wt_ref, o_ref, acc_ref):
    """K-reduction matmul with an f32 VMEM accumulator. grid = (M, N, K)."""
    @pl.when(pl.program_id(2) == 0)
    def _():
        acc_ref[...] = jnp.zeros_like(acc_ref)

    acc_ref[...] += jnp.dot(
        x_ref[...], wt_ref[...], preferred_element_type=jnp.float32
    )

    @pl.when(pl.program_id(2) == pl.num_programs(2) - 1)
    def _():
        o_ref[...] = acc_ref[...].astype(o_ref.dtype)


def _linear_kernel_single_k(x_ref, wt_ref, o_ref):
    """Fast path when K fits in one tile: no scratch, no accumulator RMW."""
    o_ref[...] = jnp.dot(
        x_ref[...], wt_ref[...], preferred_element_type=jnp.float32
    ).astype(o_ref.dtype)


# --------------------------------------------------------------------------- #
# Tile / budget selection
# --------------------------------------------------------------------------- #
def _round_up(x: int, m: int) -> int:
    return ((x + m - 1) // m) * m


def _tpu_budget():
    """Generation-aware caps keyed off physical VMEM.

    v5e/v6e: 128 MiB VMEM, 1 TensorCore  -> big tiles, high VMEM limit.
    v7x:      64 MiB VMEM, 2 TensorCores -> capped tiles, N-split for 2 TCs.
    """
    vmem_bytes = 128 * 1024 * 1024
    try:
        info = pltpu.get_tpu_info()
        vmem_bytes = int(getattr(info, "vmem_capacity_bytes", vmem_bytes))
    except Exception:
        pass

    if vmem_bytes >= 100 * 1024 * 1024:
        # v5e / v6e: v6e needs AI ~650 to reach its MXU roofline -> biggest tiles.
        return dict(
            tm_max=1024, tn_max=2048, tk_max=1024,
            vmem_limit=96 * 1024 * 1024, multi_core=False,
        )
    # v7x: 3.2 TB/s HBM means AI ~310 suffices; keep footprint well under 64 MiB.
    return dict(
        tm_max=512, tn_max=1024, tk_max=1024,
        vmem_limit=48 * 1024 * 1024, multi_core=True,
    )


# --------------------------------------------------------------------------- #
# Wrapper
# --------------------------------------------------------------------------- #
def linear_pallas(x: jax.Array, Wt: jax.Array) -> jax.Array:
    """y = x @ Wt with Wt already in (d_in, d_out) layout (cache this at init).

    Equivalent to einsum('... d_in, d_out d_in -> ... d_out', x, Wt.T).
    """
    d_in, d_out = Wt.shape
    assert x.shape[-1] == d_in, (x.shape, Wt.shape)
    lead_shape = x.shape[:-1]
    M = math.prod(lead_shape) if lead_shape else 1  # trace-time int, no sync
    x2 = x.reshape(M, d_in)

    budget = _tpu_budget()
    tm_max = budget["tm_max"]
    tn_max = budget["tn_max"]
    tk_max = budget["tk_max"]
    itemsize = jnp.dtype(x2.dtype).itemsize
    if itemsize >= 4:
        # f32 feeds: halve the widest tile so the per-step footprint
        # (double-buffered x/W/out tiles + f32 acc) stays bounded.
        tn_max = max(128, tn_max // 2)

    # ---- M tile: ragged last block handled by the cdiv grid (masked store). ----
    tm = M if M <= tm_max else tm_max

    # ---- K tile: the reduction axis must never be ragged (garbage would be
    # accumulated), so zero-pad large unaligned d_in instead. ----
    if d_in <= tk_max:
        tk, K = d_in, d_in                      # full-dim block is always legal
    else:
        tk = tk_max                             # 256-aligned, deep K tile
        K = _round_up(d_in, tk)
        if K != d_in:
            pad = K - d_in
            x2 = jnp.pad(x2, ((0, 0), (0, pad)))
            Wt = jnp.pad(Wt, ((0, pad), (0, 0)))

    # ---- N tile: lane-dense, 256-aligned cap; ragged edge masked on store. ----
    tn = d_out if d_out <= tn_max else tn_max

    gm = pl.cdiv(M, tm)
    gn = pl.cdiv(d_out, tn)
    gk = pl.cdiv(K, tk)

    # v7x has 2 TensorCores: guarantee >=2 parallel grid steps for decode-style
    # (1, 1, K) grids by splitting the N axis (128-aligned halves).
    if budget["multi_core"] and gm * gn == 1 and d_out >= 256:
        tn = _round_up((d_out + 1) // 2, 128)
        gn = pl.cdiv(d_out, tn)

    grid = (gm, gn, gk)
    single_k = gk == 1

    # Deepen weight-stream pipelining only when the per-step matmul is short
    # (small tm) and there are enough K steps for the extra buffer to help.
    w_spec_kwargs = {}
    if (not single_k) and tm <= 128 and gk >= 3:
        w_spec_kwargs = dict(pipeline_mode=pl.Buffered(3))
    w_spec = pl.BlockSpec((tk, tn), lambda i, j, k: (k, j), **w_spec_kwargs)

    bytes_accessed = (
        M * K * itemsize * gn                                   # x per N tile
        + K * d_out * jnp.dtype(Wt.dtype).itemsize * gm         # W per M tile
        + M * d_out * itemsize                                  # y written once
    )
    cost = pl.CostEstimate(
        flops=2 * M * K * d_out, transcendentals=0, bytes_accessed=bytes_accessed
    )

    kernel = _linear_kernel_single_k if single_k else _linear_kernel_acc
    scratch = [] if single_k else [pltpu.VMEM((tm, tn), jnp.float32)]

    y = pl.pallas_call(
        kernel,
        out_shape=jax.ShapeDtypeStruct((M, d_out), x.dtype),
        grid_spec=pltpu.PrefetchScalarGridSpec(
            num_scalar_prefetch=0,
            grid=grid,
            in_specs=[
                pl.BlockSpec((tm, tk), lambda i, j, k: (i, k)),  # activations
                w_spec,                                          # weights (K,N)
            ],
            out_specs=pl.BlockSpec((tm, tn), lambda i, j, k: (i, j)),
            scratch_shapes=scratch,
        ),
        compiler_params=pltpu.CompilerParams(
            # M / N tiles are independent (megacore sharding); K is the
            # accumulation axis and stays sequential + last.
            dimension_semantics=("parallel", "parallel", "arbitrary"),
            vmem_limit_bytes=budget["vmem_limit"],
        ),
        cost_estimate=cost,
    )(x2, Wt)

    return y.reshape(*lead_shape, d_out)


def linear(x: jax.Array, W: jax.Array) -> jax.Array:
    """PyTorch-layout entry point (W is (d_out, d_in)).

    Prefer `LinearPallas` / caching W.T once so the transpose isn't paid every
    forward call.
    """
    return linear_pallas(x, W.T)


# --------------------------------------------------------------------------- #
# Module-like parameter holder (mirrors the PyTorch Linear spec, bias=None)
# --------------------------------------------------------------------------- #
def init_linear_weight(key, in_features: int, out_features: int,
                       dtype=jnp.float32) -> jax.Array:
    """trunc_normal_(mean=0, std=sqrt(2/(in+out)), a=-3*std, b=3*std),
    shape (out_features, in_features) — matches the PyTorch module."""
    std = math.sqrt(2.0 / (in_features + out_features))
    w = jax.random.truncated_normal(
        key, lower=-3.0, upper=3.0,
        shape=(out_features, in_features), dtype=jnp.float32) * std
    return w.astype(dtype)


class LinearPallas:
    """Holds W in PyTorch (d_out, d_in) layout and caches the transposed
    (d_in, d_out) layout the kernel consumes — the transpose happens once at
    construction, not per forward."""

    def __init__(self, key, in_features: int, out_features: int,
                 dtype=jnp.float32):
        self.in_features = in_features
        self.out_features = out_features
        self.W = init_linear_weight(key, in_features, out_features, dtype)
        self.Wt = jnp.asarray(self.W.T)  # one-time layout change

    def __call__(self, x: jax.Array) -> jax.Array:
        return linear_pallas(x, self.Wt)


# --------------------------------------------------------------------------- #
# Self-test
# --------------------------------------------------------------------------- #
if __name__ == "__main__":
    batch, seq, d_in, d_out = 2, 8, 32, 64

    key = jax.random.PRNGKey(0)
    kx, kw = jax.random.split(key)
    x = jax.random.normal(kx, (batch, seq, d_in), dtype=jnp.float32)

    layer = LinearPallas(kw, d_in, d_out, dtype=jnp.float32)

    y = layer(x)
    y = jax.block_until_ready(y)

    # sanity check against plain-JAX reference
    y_ref = jnp.einsum("...i,oi->...o", x, layer.W)
    assert y.shape == (batch, seq, d_out)
    assert jnp.allclose(y, y_ref, atol=1e-5, rtol=1e-5)

    print("KERNEL_OK")
</pallas_src>

<mosaic_0001>
module attributes {stable_mosaic.version = 11 : i64} {
  func.func @_linear_kernel_single_k(%arg0: i32, %arg1: i32, %arg2: i32, %arg3: memref<16x32xf32, #tpu.memory_space<vmem>>, %arg4: memref<32x64xf32, #tpu.memory_space<vmem>>, %arg5: memref<16x64xf32, #tpu.memory_space<vmem>>) attributes {dimension_semantics = [#tpu.dimension_semantics<parallel>, #tpu.dimension_semantics<parallel>, #tpu.dimension_semantics<arbitrary>], iteration_bounds = array<i64: 1, 1, 1>, scalar_prefetch = 0 : i64, scratch_operands = 0 : i64, tpu.core_type = #tpu.core_type<tc>, window_params = [{transform_indices = @transform_0, window_bounds = array<i64: 16, 32>}, {transform_indices = @transform_1, window_bounds = array<i64: 32, 64>}, {transform_indices = @transform_2, window_bounds = array<i64: 16, 64>}]} {
    %c0 = arith.constant 0 : index
    %c0_0 = arith.constant 0 : index
    %0 = vector.load %arg3[%c0, %c0_0] : memref<16x32xf32, #tpu.memory_space<vmem>>, vector<16x32xf32>
    %c0_1 = arith.constant 0 : index
    %c0_2 = arith.constant 0 : index
    %1 = vector.load %arg4[%c0_1, %c0_2] : memref<32x64xf32, #tpu.memory_space<vmem>>, vector<32x64xf32>
    %cst = arith.constant dense<0.000000e+00> : vector<16x64xf32>
    %2 = tpu.matmul %0, %1, %cst {dimension_numbers = #tpu.dot_dimension_numbers<[1], [0], [0], [1], [0, 0, 1, 1], [], []>} : vector<16x32xf32>, vector<32x64xf32>, vector<16x64xf32> -> vector<16x64xf32>
    %c0_3 = arith.constant 0 : index
    %c0_4 = arith.constant 0 : index
    %3 = vector.load %arg5[%c0_3, %c0_4] : memref<16x64xf32, #tpu.memory_space<vmem>>, vector<16x64xf32>
    tpu.vector_store %arg5[%c0_3, %c0_4], %2 {strides = array<i32>} : memref<16x64xf32, #tpu.memory_space<vmem>>, vector<16x64xf32>,
    return
  }
  func.func @transform_0(%arg0: i32, %arg1: i32, %arg2: i32) -> (i32, i32) {
    %c0_i32 = arith.constant 0 : i32
    return %arg0, %arg2 : i32, i32
  }
  func.func @transform_1(%arg0: i32, %arg1: i32, %arg2: i32) -> (i32, i32) {
    %c0_i32 = arith.constant 0 : i32
    return %arg2, %arg1 : i32, i32
  }
  func.func @transform_2(%arg0: i32, %arg1: i32, %arg2: i32) -> (i32, i32) {
    %c0_i32 = arith.constant 0 : i32
    return %arg0, %arg1 : i32, i32
  }
}

</mosaic_0001>

<llo_original>
// kernel: tpu_custom_call.1
$region0: #{tpu_custom_call.1}
  #allocation0 [shape = 'u32[]', space=smem, size = 0x4, offset = 0x4, fixed_abs, tag = 'smem constant byte address 0x4 - core index']
  #allocation1 [shape = 'u32[144,128]{1,0:T(1,128)}', space=vmem, size = 0x12000, scoped, tag = 'internal scratch']
  %s0 = inlined_call_operand.hbm [shape: f32[16,32], index: 0, kind: input, shape index: {}]
  %s1 = inlined_call_operand.hbm [shape: f32[32,64], index: 1, kind: input, shape index: {}]
  %s2 = inlined_call_operand.hbm [shape: f32[16,64], index: 2, kind: output, shape index: {}]
  %s3 = sld [smem:[#allocation0]]
  $region26: #{tpu_custom_call.1} parent=0
    _
  %s5 = ssub.s32 1, %s3
  %s6 = scalar_select 0, %s5, %s3
  $region1: #{tpu_custom_call.1} parent=0
    #allocation2 [shape = 'u8[8192]{0}', space=vmem, size = 0x2000, scoped, tag = 'input window, operand 0, single buffered']
    #allocation3 [shape = 's32[1]{0}', space=sflag, size = 0x4, scoped, tag = 'scoped memory for tpu_custom_call.1']
    #allocation4 [shape = 's32[1]{0}', space=sflag, size = 0x4, scoped, tag = 'scoped memory for tpu_custom_call.1']
    #allocation5 [shape = 'u8[16384]{0}', space=vmem, size = 0x4000, scoped, tag = 'input window, operand 1, single buffered']
    #allocation6 [shape = 's32[1]{0}', space=sflag, size = 0x4, scoped, tag = 'scoped memory for tpu_custom_call.1']
    #allocation7 [shape = 'u8[8192]{0}', space=vmem, size = 0x2000, scoped, tag = 'output window, operand 0, single buffered']
    %7 = vsyncpa [#allocation3], 0
    %8 = vsyncpa [#allocation6], 0
    %9 = vsyncpa [#allocation4], 0
    // Predicated region
    $region2: #{tpu_custom_call.1} parent=1 // pred_check
      _
    $region3: #{tpu_custom_call.1} parent=1 // pred_check_branch
      %11 = sbr.rel (0) target = $region5
    $region4: #{tpu_custom_call.1} parent=1 // pred_region
      %s13 = ssub.s32 256, 256
      %14 = vsyncadd [#allocation3], %s13
      %s15 = sshll.u32 [#allocation2], 4
      %s16 = int_to_ptr.vmem [resolvable:$true] %s15
      %21 = dma.hbm_to_vmem [thread:$0]  %s0, 256, %s16, [#allocation3], 128, 128, 8
    $region5: #{tpu_custom_call.1} parent=1 // pred_fallthru
      _
    // Predicated region
    $region6: #{tpu_custom_call.1} parent=1 // pred_check
      _
    $region7: #{tpu_custom_call.1} parent=1 // pred_check_branch
      %23 = sbr.rel (0) target = $region9
    $region8: #{tpu_custom_call.1} parent=1 // pred_region
      %s25 = ssub.s32 512, 512
      %26 = vsyncadd [#allocation6], %s25
      %s27 = sshll.u32 [#allocation5], 4
      %s28 = int_to_ptr.vmem [resolvable:$true] %s27
      %33 = dma.hbm_to_vmem [thread:$0]  %s1, 512, %s28, [#allocation6], 128, 128, 8
    $region9: #{tpu_custom_call.1} parent=1 // pred_fallthru
      _
    // Predicated region
    $region10: #{tpu_custom_call.1} parent=1 // pred_check
      _
    $region11: #{tpu_custom_call.1} parent=1 // pred_check_branch
      %35 = sbr.rel (0) target = $region13
    $region12: #{tpu_custom_call.1} parent=1 // pred_region
      %36 = dma.done [#allocation3], 256
    $region13: #{tpu_custom_call.1} parent=1 // pred_fallthru
      _
    // Predicated region
    $region14: #{tpu_custom_call.1} parent=1 // pred_check
      _
    $region15: #{tpu_custom_call.1} parent=1 // pred_check_branch
      %38 = sbr.rel (0) target = $region17
    $region16: #{tpu_custom_call.1} parent=1 // pred_region
      %39 = dma.done [#allocation6], 512
    $region17: #{tpu_custom_call.1} parent=1 // pred_fallthru
      _
    %v40 = vld [vmem:[#allocation2] sm:$0xff]
    %v41 = vld [vmem:[#allocation2 + $0x8] sm:$0xff]
    %v42 = vld [vmem:[#allocation5] sm:$0xff]
    %v43 = vld [vmem:[#allocation5 + $0x8] sm:$0xff]
    %v44 = vld [vmem:[#allocation5 + $0x10] sm:$0xff]
    %v45 = vld [vmem:[#allocation5 + $0x18] sm:$0xff]
    %vm46 = vcmask 261120
    %v48 = vsel %vm46, %v40, 0
    %v51 = vsel %vm46, %v41, 0
    %53 = vmatprep.subr.mxu0 0.0
    %54 = vmatpush1.msra.mxu0 %v42
    %55 = vmatprep.subr.mxu0 0.0
    %56 = vmatpush1.msra.mxu0 %v43
    %57 = vmatprep.subr.mxu0 0.0
    %58 = vmatpush1.msra.mxu0 %v44
    %59 = vmatprep.subr.mxu0 0.0
    %60 = vmatpush1.msra.mxu0 %v45
    %61 = vmatprep.subr.mxu0 0.0
    %62 = vmatpush1.msra.mxu0 0.0
    %63 = vmatprep.subr.mxu0 0.0
    %64 = vmatpush1.msra.mxu0 0.0
    %65 = vmatprep.subr.mxu0 0.0
    %66 = vmatpush1.msra.mxu0 0.0
    %67 = vmatprep.subr.mxu0 0.0
    %68 = vmatpush1.msra.mxu0 0.0
    %69 = vmatprep.subr.mxu0 0.0
    %70 = vmatpush1.msra.mxu0 0.0
    %71 = vmatprep.subr.mxu0 0.0
    %72 = vmatpush1.msra.mxu0 0.0
    %73 = vmatprep.subr.mxu0 0.0
    %74 = vmatpush1.msra.mxu0 0.0
    %75 = vmatprep.subr.mxu0 0.0
    %76 = vmatpush1.msra.mxu0 0.0
    %77 = vmatprep.subr.mxu0 0.0
    %78 = vmatpush1.msra.mxu0 0.0
    %79 = vmatprep.subr.mxu0 0.0
    %80 = vmatpush1.msra.mxu0 0.0
    %81 = vmatprep.subr.mxu0 0.0
    %82 = vmatpush1.msra.mxu0 0.0
    %83 = vmatprep.subr.mxu0 0.0
    %84 = vmatpush1.msra.mxu0 0.0
    %85 = vmatprep.subr.mxu0 0.0
    %86 = vmatpush1.msra.mxu0 0.0
    %87 = vmatprep.subr.mxu0 0.0
    %88 = vmatpush1.msra.mxu0 0.0
    %89 = vmatprep.subr.mxu0 0.0
    %90 = vmatpush1.msra.mxu0 0.0
    %91 = vmatprep.subr.mxu0 0.0
    %92 = vmatpush1.msra.mxu0 0.0
    %93 = vmatprep.subr.mxu0 0.0
    %94 = vmatpush1.msra.mxu0 0.0
    %95 = vmatprep.subr.mxu0 0.0
    %96 = vmatpush1.msra.mxu0 0.0
    %97 = vmatprep.subr.mxu0 0.0
    %98 = vmatpush1.msra.mxu0 0.0
    %99 = vmatprep.subr.mxu0 0.0
    %100 = vmatpush1.msra.mxu0 0.0
    %101 = vmatprep.subr.mxu0 0.0
    %102 = vmatpush1.msra.mxu0 0.0
    %103 = vmatprep.subr.mxu0 0.0
    %104 = vmatpush1.msra.mxu0 0.0
    %105 = vmatprep.subr.mxu0 0.0
    %106 = vmatpush1.msra.mxu0 0.0
    %107 = vmatprep.subr.mxu0 0.0
    %108 = vmatpush1.msra.mxu0 0.0
    %109 = vmatprep.subr.mxu0 0.0
    %110 = vmatpush1.msra.mxu0 0.0
    %111 = vmatprep.subr.mxu0 0.0
    %112 = vmatpush1.msra.mxu0 0.0
    %113 = vmatprep.subr.mxu0 0.0
    %114 = vmatpush1.msra.mxu0 0.0
    %115 = vmatprep.subr.mxu0 0.0
    %116 = vmatpush1.msra.mxu0 0.0
    %117 = vmatprep.mubr.f32.mxu0 0.0
    %118 = vmatmul.mubr.f32.gmra.mrb[0].mxu0 %v48
    %v119 = vpop.f32.mrb[0].mxu0
    %v120 = vadd.f32 0.0, %v119
    %v121 = vpop.f32.mrb[0].mxu0
    %122 = vmatprep.mubr.f32.mxu0 0.0
    %123 = vmatmul.mubr.f32.gmra.mrb[0].mxu0 %v51
    %v124 = vpop.f32.mrb[0].mxu0
    %v125 = vadd.f32 0.0, %v124
    %v126 = vpop.f32.mrb[0].mxu0
    %127 = vdwg.mxu0
    %vm128 = vcmask 523264
    %129 = vst.msk [vmem:[#allocation7] sm:$0xff] %vm128, %v120
    %130 = vst.msk [vmem:[#allocation7 + $0x8] sm:$0xff] %vm128, %v125
    // Predicated region
    $region18: #{tpu_custom_call.1} parent=1 // pred_check
      _
    $region19: #{tpu_custom_call.1} parent=1 // pred_check_branch
      %132 = sbr.rel (0) target = $region21
    $region20: #{tpu_custom_call.1} parent=1 // pred_region
      %s134 = ssub.s32 256, 256
      %135 = vsyncadd [#allocation4], %s134
      %s136 = sshll.u32 [#allocation7], 4
      %s137 = int_to_ptr.vmem [resolvable:$true] %s136
      %142 = dma.vmem_to_hbm [thread:$0]  %s137, 256, %s2, [#allocation4], 128, 128, 8
    $region21: #{tpu_custom_call.1} parent=1 // pred_fallthru
      _
    // Predicated region
    $region22: #{tpu_custom_call.1} parent=1 // pred_check
      _
    $region23: #{tpu_custom_call.1} parent=1 // pred_check_branch
      %144 = sbr.rel (0) target = $region25
    $region24: #{tpu_custom_call.1} parent=1 // pred_region
      %145 = dma.done [#allocation4], 256
    $region25: #{tpu_custom_call.1} parent=1 // pred_fallthru
      _
    %146 = vsyncpa [#allocation3], 1
    %147 = vsyncpa [#allocation6], 1
    %148 = vsyncpa [#allocation4], 1

</llo_original>
